<compile_context>
chip_gen: v5e
topology: v5e:2x2
jax: 0.10.0
libtpu: 0.0.40
codegen_flags: <defaults>
</compile_context>

<pallas_src>
import functools

import jax
import jax.numpy as jnp
from jax import lax
from jax.experimental import pallas as pl
from jax.experimental.pallas import tpu as pltpu

# ----------------------------------------------------------------------------
# DenseNet-201 configuration (torchvision.models.densenet201), classifier -> 2
# ----------------------------------------------------------------------------
GROWTH_RATE = 32
BN_SIZE = 4
BLOCK_CONFIG = (6, 12, 48, 32)
NUM_INIT_FEATURES = 64
NUM_CLASSES = 2
BN_EPS = 1e-5

VMEM_LIMIT = 32 * 1024 * 1024     # fits every tile below; <= physical on v7x


def _round_up(x, m):
    return ((x + m - 1) // m) * m


def _m_tile(M):
    """(tm, Mp) for the matmul M axis.

    16-row multiples (bf16 packs 16 sublanes per vreg); >= 2 blocks whenever M
    allows so the 'parallel' grid keeps both v7x TensorCores busy; 256-row
    tiles for large M."""
    if M > 512:
        return 256, _round_up(M, 256)
    if M > 16:
        tm = _round_up((M + 1) // 2, 16)
        return tm, 2 * tm
    return 16, 16


def _ew_tile(M, Cp):
    """(tm, Mp) for elementwise / pooling kernels.  Rows capped for wide-C
    slabs so v5e's 16 MiB default scoped VMEM is never approached."""
    cap = 256 if Cp >= 1024 else 512
    if M <= cap:
        tm = _round_up(max(M, 16), 16)
        return tm, tm
    return cap, _round_up(M, cap)


# ----------------------------------------------------------------------------
# Pallas kernel 1: single-shot MXU matmul (full K, full N, 1-D grid over M),
# bf16 operands, f32 accumulation on the MXU, bf16 lane-dense output.
# Optional fused prologue: a <- relu(a * scale + shift) with per-K-column
# scale/shift (folded BatchNorm + ReLU of the preceding layer), in bf16.
# ----------------------------------------------------------------------------
def _mm_plain_kernel(a_ref, b_ref, o_ref):
    o_ref[...] = jnp.dot(a_ref[...], b_ref[...],
                         preferred_element_type=jnp.float32).astype(o_ref.dtype)


def _mm_fused_kernel(a_ref, b_ref, s_ref, t_ref, o_ref):
    # bf16 prologue: keeps the VPU work ~3 packed ops/elem so the MXU stays
    # the binding slot on v6e/v7x; lowers to f32 on v5e (old behaviour).
    a = jnp.maximum(a_ref[...] * s_ref[...] + t_ref[...], 0).astype(jnp.bfloat16)
    o_ref[...] = jnp.dot(a, b_ref[...],
                         preferred_element_type=jnp.float32).astype(o_ref.dtype)


@functools.partial(jax.jit, static_argnames=("tm",))
def _mm_plain(a_p, w_p, *, tm):
    Mp = a_p.shape[0]
    Kp, Np = w_p.shape
    return pl.pallas_call(
        _mm_plain_kernel,
        out_shape=jax.ShapeDtypeStruct((Mp, Np), jnp.bfloat16),
        grid=(Mp // tm,),
        in_specs=[pl.BlockSpec((tm, Kp), lambda i: (i, 0)),
                  pl.BlockSpec((Kp, Np), lambda i: (0, 0))],
        out_specs=pl.BlockSpec((tm, Np), lambda i: (i, 0)),
        compiler_params=pltpu.CompilerParams(
            dimension_semantics=("parallel",),
            vmem_limit_bytes=VMEM_LIMIT),
    )(a_p, w_p)


@functools.partial(jax.jit, static_argnames=("tm",))
def _mm_fused(a_p, w_p, s_p, t_p, *, tm):
    Mp = a_p.shape[0]
    Kp, Np = w_p.shape
    return pl.pallas_call(
        _mm_fused_kernel,
        out_shape=jax.ShapeDtypeStruct((Mp, Np), jnp.bfloat16),
        grid=(Mp // tm,),
        # A may be wider than Kp (per-block feature buffer); the (tm, Kp)
        # block with a constant 0 column index reads its K-prefix directly.
        in_specs=[pl.BlockSpec((tm, Kp), lambda i: (i, 0)),
                  pl.BlockSpec((Kp, Np), lambda i: (0, 0)),
                  pl.BlockSpec((1, Kp), lambda i: (0, 0)),
                  pl.BlockSpec((1, Kp), lambda i: (0, 0))],
        out_specs=pl.BlockSpec((tm, Np), lambda i: (i, 0)),
        compiler_params=pltpu.CompilerParams(
            dimension_semantics=("parallel",),
            vmem_limit_bytes=VMEM_LIMIT),
    )(a_p, w_p, s_p, t_p)


def _run_mm(a_p, cp, tm):
    if cp["fused"]:
        return _mm_fused(a_p, cp["w"], cp["scale"], cp["shift"], tm=tm)
    return _mm_plain(a_p, cp["w"], tm=tm)


# ----------------------------------------------------------------------------
# Pallas kernel 2: standalone fused BN(running stats)+ReLU (norm0 / norm5)
# scale = gamma*rsqrt(var+eps), shift = beta-mean*scale (precomputed, bf16)
# ----------------------------------------------------------------------------
def _bn_relu_kernel(x_ref, s_ref, t_ref, o_ref):
    o_ref[...] = jnp.maximum(x_ref[...] * s_ref[...] + t_ref[...],
                             0).astype(o_ref.dtype)


@functools.partial(jax.jit, static_argnames=("tm",))
def _bn_relu_padded(x_p, s_p, t_p, *, tm):
    Mp, Cp = x_p.shape
    return pl.pallas_call(
        _bn_relu_kernel,
        out_shape=jax.ShapeDtypeStruct((Mp, Cp), jnp.bfloat16),
        grid=(Mp // tm,),
        in_specs=[pl.BlockSpec((tm, Cp), lambda i: (i, 0)),
                  pl.BlockSpec((1, Cp), lambda i: (0, 0)),
                  pl.BlockSpec((1, Cp), lambda i: (0, 0))],
        out_specs=pl.BlockSpec((tm, Cp), lambda i: (i, 0)),
        compiler_params=pltpu.CompilerParams(
            dimension_semantics=("parallel",),
            vmem_limit_bytes=VMEM_LIMIT),
    )(x_p, s_p, t_p)


def pallas_bn_relu(x2d, np_):
    M, C = x2d.shape
    Cp = np_["scale"].shape[1]
    tm, Mp = _ew_tile(M, Cp)
    x_p = jnp.pad(x2d.astype(jnp.bfloat16), ((0, Mp - M), (0, Cp - C)))
    return _bn_relu_padded(x_p, np_["scale"], np_["shift"], tm=tm)[:M, :C]


def _bn_relu_nhwc(x, np_):
    n, h, w, c = x.shape
    return pallas_bn_relu(x.reshape(n * h * w, c), np_).reshape(n, h, w, c)


# ----------------------------------------------------------------------------
# Pallas kernel 3: window reduction (max / mean) over stacked pooling windows,
# bf16 slabs, tiled along the row (M) dimension.
# ----------------------------------------------------------------------------
def _pool_max_kernel(x_ref, o_ref):
    o_ref[...] = jnp.max(x_ref[...], axis=0)


def _pool_mean_kernel(x_ref, o_ref):
    o_ref[...] = jnp.mean(x_ref[...].astype(jnp.float32),
                          axis=0).astype(o_ref.dtype)


@functools.partial(jax.jit, static_argnames=("op", "tm"))
def _pool_padded(stacked_p, *, op, tm):
    Kw, Mp, Cp = stacked_p.shape
    kernel = _pool_max_kernel if op == "max" else _pool_mean_kernel
    return pl.pallas_call(
        kernel,
        out_shape=jax.ShapeDtypeStruct((Mp, Cp), jnp.bfloat16),
        grid=(Mp // tm,),
        in_specs=[pl.BlockSpec((Kw, tm, Cp), lambda i: (0, i, 0))],
        out_specs=pl.BlockSpec((tm, Cp), lambda i: (i, 0)),
        compiler_params=pltpu.CompilerParams(
            dimension_semantics=("parallel",),
            vmem_limit_bytes=VMEM_LIMIT),
    )(stacked_p)


def pallas_window_reduce(stacked, op):
    Kw, M, C = stacked.shape
    Cp = _round_up(C, 128)
    tm, Mp = _ew_tile(M, Cp)
    x_p = jnp.pad(stacked.astype(jnp.bfloat16),
                  ((0, 0), (0, Mp - M), (0, Cp - C)))
    return _pool_padded(x_p, op=op, tm=tm)[:M, :C]


# ----------------------------------------------------------------------------
# Conv / pooling glue (im2col + window extraction); all math runs in Pallas
# ----------------------------------------------------------------------------
def _im2col(x, kh, kw, stride, pad):
    N, H, W, Cin = x.shape
    OH = (H + 2 * pad - kh) // stride + 1
    OW = (W + 2 * pad - kw) // stride + 1
    if kh == 1 and kw == 1 and stride == 1 and pad == 0:
        return x.reshape(N * H * W, Cin), OH, OW
    xp = jnp.pad(x, ((0, 0), (pad, pad), (pad, pad), (0, 0)))
    cols = []
    for i in range(kh):
        for j in range(kw):
            cols.append(lax.slice(
                xp, (0, i, j, 0),
                (N, i + stride * (OH - 1) + 1, j + stride * (OW - 1) + 1, Cin),
                (1, stride, stride, 1)))
    patches = jnp.stack(cols, axis=3)                 # (N, OH, OW, kh*kw, Cin)
    return patches.reshape(N * OH * OW, kh * kw * Cin), OH, OW


def pallas_conv2d(x, cp):
    """NHWC conv via im2col + Pallas matmul; BN+ReLU fused if cp['fused']."""
    n = x.shape[0]
    a, OH, OW = _im2col(x, cp["kh"], cp["kw"], cp["stride"], cp["pad"])
    M, K = a.shape
    tm, Mp = _m_tile(M)
    a_p = jnp.pad(a.astype(jnp.bfloat16), ((0, Mp - M), (0, cp["Kp"] - K)))
    out = _run_mm(a_p, cp, tm)
    return out[:M, :cp["N"]].reshape(n, OH, OW, cp["N"])


def max_pool_3x3_s2_p1(x):
    # TODO(synk): windows are still materialized as a (9, M, C) bf16 slab in
    #             HBM; in-kernel strided pl.ds loads would cut this ~9x more.
    N, H, W, C = x.shape
    OH = (H + 2 - 3) // 2 + 1
    OW = (W + 2 - 3) // 2 + 1
    xp = jnp.pad(x, ((0, 0), (1, 1), (1, 1), (0, 0)),
                 constant_values=-jnp.inf)
    wins = []
    for i in range(3):
        for j in range(3):
            wins.append(lax.slice(
                xp, (0, i, j, 0),
                (N, i + 2 * (OH - 1) + 1, j + 2 * (OW - 1) + 1, C),
                (1, 2, 2, 1)))
    stacked = jnp.stack(wins, axis=0).reshape(9, N * OH * OW, C)
    return pallas_window_reduce(stacked, "max").reshape(N, OH, OW, C)


def avg_pool_2x2_s2(x):
    N, H, W, C = x.shape
    OH, OW = H // 2, W // 2
    wins = []
    for i in range(2):
        for j in range(2):
            wins.append(lax.slice(
                x, (0, i, j, 0),
                (N, i + 2 * (OH - 1) + 1, j + 2 * (OW - 1) + 1, C),
                (1, 2, 2, 1)))
    stacked = jnp.stack(wins, axis=0).reshape(4, N * OH * OW, C)
    return pallas_window_reduce(stacked, "mean").reshape(N, OH, OW, C)


def global_avg_pool(x):
    N, H, W, C = x.shape
    stacked = jnp.transpose(x, (1, 2, 0, 3)).reshape(H * W, N, C)
    return pallas_window_reduce(stacked, "mean")      # (N, C)


# ----------------------------------------------------------------------------
# Deterministic parameter construction (synthetic weights, no checkpoint)
# ----------------------------------------------------------------------------
def _conv_weight(key, kh, kw, cin, cout):
    fan_in = kh * kw * cin
    return (jax.random.normal(key, (kh, kw, cin, cout), jnp.float32)
            * jnp.sqrt(2.0 / fan_in))


def _bn_params(c):
    return dict(gamma=jnp.ones((c,), jnp.float32),
                beta=jnp.zeros((c,), jnp.float32),
                mean=jnp.zeros((c,), jnp.float32),
                var=jnp.ones((c,), jnp.float32))


def init_ppi_model_params(key):
    keys = iter(jax.random.split(key, 256))
    params = {
        "conv0": _conv_weight(next(keys), 7, 7, 3, NUM_INIT_FEATURES),
        "norm0": _bn_params(NUM_INIT_FEATURES),
        "blocks": [],
        "transitions": [],
    }
    nfeat = NUM_INIT_FEATURES
    for bi, nlayers in enumerate(BLOCK_CONFIG):
        layers = []
        for li in range(nlayers):
            cin = nfeat + li * GROWTH_RATE
            layers.append(dict(
                norm1=_bn_params(cin),
                conv1=_conv_weight(next(keys), 1, 1, cin,
                                   BN_SIZE * GROWTH_RATE),
                norm2=_bn_params(BN_SIZE * GROWTH_RATE),
                conv2=_conv_weight(next(keys), 3, 3, BN_SIZE * GROWTH_RATE,
                                   GROWTH_RATE),
            ))
        params["blocks"].append(layers)
        nfeat += nlayers * GROWTH_RATE
        if bi != len(BLOCK_CONFIG) - 1:
            params["transitions"].append(dict(
                norm=_bn_params(nfeat),
                conv=_conv_weight(next(keys), 1, 1, nfeat, nfeat // 2),
            ))
            nfeat //= 2
    params["norm5"] = _bn_params(nfeat)                       # nfeat == 1920
    params["classifier_w"] = (jax.random.normal(next(keys),
                                                (nfeat, NUM_CLASSES),
                                                jnp.float32)
                              / jnp.sqrt(float(nfeat)))
    params["classifier_b"] = jnp.zeros((NUM_CLASSES,), jnp.float32)
    return params


# ----------------------------------------------------------------------------
# One-time parameter preparation: fold BN into per-K-column scale/shift, pad
# and cast weights/vectors to bf16 (Kp, Np) slabs once; fold the classifier
# bias into an extra K row (activated by shift=1 on a zero input column).
# ----------------------------------------------------------------------------
def _fold_bn(bn):
    scale = bn["gamma"] * lax.rsqrt(bn["var"] + BN_EPS)
    shift = bn["beta"] - bn["mean"] * scale
    return scale, shift


def _prep_conv(w, bn=None, bias=None, stride=1, pad=0):
    kh, kw, cin, cout = w.shape
    K, N = kh * kw * cin, cout
    Kp = _round_up(K + (1 if bias is not None else 0), 128)
    Np = _round_up(max(N, 128), 128)
    w_p = jnp.zeros((Kp, Np), jnp.float32).at[:K, :N].set(
        w.reshape(K, N).astype(jnp.float32))
    fused = (bn is not None) or (bias is not None)
    scale_p = shift_p = None
    if fused:
        if bn is not None:
            s, t = _fold_bn(bn)
            s, t = jnp.tile(s, kh * kw), jnp.tile(t, kh * kw)
        else:
            # NOTE: identity prologue; relu is a no-op because the classifier
            # input (avg-pooled relu features) is always non-negative.
            s = jnp.ones((K,), jnp.float32)
            t = jnp.zeros((K,), jnp.float32)
        scale_p = jnp.zeros((1, Kp), jnp.float32).at[0, :K].set(s)
        shift_p = jnp.zeros((1, Kp), jnp.float32).at[0, :K].set(t)
        if bias is not None:
            w_p = w_p.at[K, :N].set(bias.astype(jnp.float32))
            shift_p = shift_p.at[0, K].set(1.0)    # relu(0*s+1)=1 -> bias row
        scale_p = scale_p.astype(jnp.bfloat16)
        shift_p = shift_p.astype(jnp.bfloat16)
    return dict(w=w_p.astype(jnp.bfloat16), scale=scale_p, shift=shift_p,
                fused=fused, K=K, N=N, Kp=Kp, Np=Np,
                kh=kh, kw=kw, stride=stride, pad=pad)


def _prep_norm(bn):
    C = bn["gamma"].shape[0]
    Cp = _round_up(C, 128)
    s, t = _fold_bn(bn)
    return dict(
        scale=jnp.zeros((1, Cp), jnp.float32).at[0, :C].set(s)
                 .astype(jnp.bfloat16),
        shift=jnp.zeros((1, Cp), jnp.float32).at[0, :C].set(t)
                 .astype(jnp.bfloat16),
        C=C)


def prepare_params(params):
    prep = {
        "conv0": _prep_conv(params["conv0"], stride=2, pad=3),
        "norm0": _prep_norm(params["norm0"]),
        "blocks": [],
        "transitions": [],
        "norm5": _prep_norm(params["norm5"]),
        "classifier": _prep_conv(
            params["classifier_w"].reshape(1, 1, -1, NUM_CLASSES),
            bias=params["classifier_b"]),
    }
    for layers in params["blocks"]:
        prep["blocks"].append([
            dict(conv1=_prep_conv(lp["conv1"], bn=lp["norm1"]),
                 conv2=_prep_conv(lp["conv2"], bn=lp["norm2"], pad=1))
            for lp in layers])
    for tp in params["transitions"]:
        prep["transitions"].append(dict(conv=_prep_conv(tp["conv"],
                                                        bn=tp["norm"])))
    return prep


# ----------------------------------------------------------------------------
# Forward pass (mirrors torchvision DenseNet.forward + PPIModel.squeeze)
# ----------------------------------------------------------------------------
def ppi_model_forward(prep, x_nchw):
    x = jnp.transpose(x_nchw, (0, 2, 3, 1)).astype(jnp.bfloat16)  # NCHW->NHWC
    # stem: conv7x7/s2 -> BN -> ReLU -> maxpool3x3/s2
    x = pallas_conv2d(x, prep["conv0"])
    x = _bn_relu_nhwc(x, prep["norm0"])
    x = max_pool_3x3_s2_p1(x)

    for bi, layers in enumerate(prep["blocks"]):
        n_img, H, W, C0 = x.shape
        M = n_img * H * W
        tm, Mp = _m_tile(M)
        C_total = C0 + len(layers) * GROWTH_RATE        # multiple of 128
        # Per-block feature buffer: replaces the O(L^2) concatenate chain.
        # Conv1/transition matmuls read a K-prefix of it directly (no per-layer
        # pad/concat copy); unwritten channel slots are zero and their weight
        # rows are zero-padded, so they contribute nothing.
        buf = jnp.zeros((Mp, C_total), jnp.bfloat16)
        buf = buf.at[:M, :C0].set(x.reshape(M, C0))
        off = C0
        for lp in layers:
            c1 = lp["conv1"]
            y1 = _run_mm(buf, c1, tm)[:M, :c1["N"]]      # norm1+relu+1x1
            y1 = y1.reshape(n_img, H, W, c1["N"])
            y2 = pallas_conv2d(y1, lp["conv2"])          # norm2+relu+3x3 -> 32
            buf = buf.at[:M, off:off + GROWTH_RATE].set(
                y2.reshape(M, GROWTH_RATE))
            off += GROWTH_RATE
        if bi != len(prep["blocks"]) - 1:
            tc = prep["transitions"][bi]["conv"]
            t = _run_mm(buf, tc, tm)[:M, :tc["N"]]       # norm+relu+1x1
            x = avg_pool_2x2_s2(t.reshape(n_img, H, W, tc["N"]))
        else:
            x = buf[:M].reshape(n_img, H, W, C_total)

    # norm5 + F.relu + adaptive avg pool (1,1) + flatten + Linear(1920, 2)
    x = _bn_relu_nhwc(x, prep["norm5"])
    feat = global_avg_pool(x)                            # (N, 1920)
    n = feat.shape[0]
    logits = pallas_conv2d(feat.reshape(n, 1, 1, -1), prep["classifier"])
    logits = logits.reshape(n, NUM_CLASSES).astype(jnp.float32)
    return jnp.squeeze(logits)                           # x.squeeze()


# ----------------------------------------------------------------------------
if __name__ == "__main__":
    key = jax.random.PRNGKey(0)
    pkey, xkey = jax.random.split(key)
    raw_params = init_ppi_model_params(pkey)
    params = prepare_params(raw_params)
    # smallest input that survives all strided stages of densenet201
    x = jax.random.normal(xkey, (2, 3, 32, 32), jnp.float32)
    out = ppi_model_forward(params, x)
    out = jax.block_until_ready(out)
    assert out.shape == (2, NUM_CLASSES), out.shape
    assert bool(jnp.all(jnp.isfinite(out)))
    print("KERNEL_OK")
</pallas_src>

<mosaic_0001>
module attributes {stable_mosaic.version = 11 : i64} {
  func.func @_mm_plain_kernel(%arg0: i32, %arg1: memref<256x256xbf16, #tpu.memory_space<vmem>>, %arg2: memref<256x128xbf16, #tpu.memory_space<vmem>>, %arg3: memref<256x128xbf16, #tpu.memory_space<vmem>>) attributes {dimension_semantics = [#tpu.dimension_semantics<parallel>], iteration_bounds = array<i64: 2>, scalar_prefetch = 0 : i64, scratch_operands = 0 : i64, tpu.core_type = #tpu.core_type<tc>, window_params = [{transform_indices = @transform_0, window_bounds = array<i64: 256, 256>}, {pipeline_mode = #tpu.pipeline_mode<synchronous>, transform_indices = @transform_1, window_bounds = array<i64: 256, 128>}, {transform_indices = @transform_2, window_bounds = array<i64: 256, 128>}]} {
    %c0 = arith.constant 0 : index
    %c0_0 = arith.constant 0 : index
    %0 = vector.load %arg1[%c0, %c0_0] : memref<256x256xbf16, #tpu.memory_space<vmem>>, vector<256x256xbf16>
    %c0_1 = arith.constant 0 : index
    %c0_2 = arith.constant 0 : index
    %1 = vector.load %arg2[%c0_1, %c0_2] : memref<256x128xbf16, #tpu.memory_space<vmem>>, vector<256x128xbf16>
    %cst = arith.constant dense<0.000000e+00> : vector<256x128xf32>
    %2 = tpu.matmul %0, %1, %cst {dimension_numbers = #tpu.dot_dimension_numbers<[1], [0], [0], [1], [0, 0, 1, 1], [], []>} : vector<256x256xbf16>, vector<256x128xbf16>, vector<256x128xf32> -> vector<256x128xf32>
    %3 = arith.truncf %2 : vector<256x128xf32> to vector<256x128xbf16>
    %c0_3 = arith.constant 0 : index
    %c0_4 = arith.constant 0 : index
    %4 = vector.load %arg3[%c0_3, %c0_4] : memref<256x128xbf16, #tpu.memory_space<vmem>>, vector<256x128xbf16>
    tpu.vector_store %arg3[%c0_3, %c0_4], %3 {strides = array<i32>} : memref<256x128xbf16, #tpu.memory_space<vmem>>, vector<256x128xbf16>,
    return
  }
  func.func @transform_0(%arg0: i32) -> (i32, i32) {
    %c0_i32 = arith.constant 0 : i32
    %c0_i32_0 = arith.constant 0 : i32
    return %arg0, %c0_i32 : i32, i32
  }
  func.func @transform_1(%arg0: i32) -> (i32, i32) {
    %c0_i32 = arith.constant 0 : i32
    %c0_i32_0 = arith.constant 0 : i32
    %c0_i32_1 = arith.constant 0 : i32
    return %c0_i32, %c0_i32_0 : i32, i32
  }
  func.func @transform_2(%arg0: i32) -> (i32, i32) {
    %c0_i32 = arith.constant 0 : i32
    %c0_i32_0 = arith.constant 0 : i32
    return %arg0, %c0_i32 : i32, i32
  }
}

</mosaic_0001>

<llo_original>
// kernel: _mm_plain.1
$region0: #{_mm_plain.1}
  #allocation0 [shape = 'u32[]', space=smem, size = 0x4, offset = 0x4, fixed_abs, tag = 'smem constant byte address 0x4 - core index']
  #allocation1 [shape = 'u32[72,128]{1,0:T(1,128)}', space=vmem, size = 0x9000, scoped, tag = 'internal scratch']
  %s0 = inlined_call_operand.hbm [shape: bf16[512,256], index: 0, kind: input, shape index: {}]
  %s1 = inlined_call_operand.hbm [shape: bf16[256,128], index: 1, kind: input, shape index: {}]
  %s2 = inlined_call_operand.hbm [shape: bf16[512,128], index: 2, kind: output, shape index: {}]
  %s3 = sld [smem:[#allocation0]]
  $region49: #{_mm_plain.1} parent=0
    _
  %s5 = ssub.s32 1, %s3
  %s6 = scalar_select 0, %s5, %s3
  $region1: #{_mm_plain.1} parent=0
    #allocation2 [shape = 'u8[262144]{0}', space=vmem, size = 0x40000, scoped, tag = 'input window, operand 0']
    #allocation3 [shape = 's32[2]{0}', space=sflag, size = 0x8, scoped, tag = 'scoped memory for _mm_plain.1']
    #allocation4 [shape = 's32[2]{0}', space=sflag, size = 0x8, scoped, tag = 'scoped memory for _mm_plain.1']
    #allocation5 [shape = 'u8[65536]{0}', space=vmem, size = 0x10000, scoped, tag = 'input window, operand 1, single buffered']
    #allocation6 [shape = 's32[1]{0}', space=sflag, size = 0x4, scoped, tag = 'scoped memory for _mm_plain.1']
    #allocation7 [shape = 'u8[131072]{0}', space=vmem, size = 0x20000, scoped, tag = 'output window, operand 0']
    %7 = vsyncpa [#allocation3], 0
    %s8 = scalar_lea.sflag [#allocation3], 1
    %9 = vsyncpa %s8, 0
    %10 = vsyncpa [#allocation6], 0
    %11 = vsyncpa [#allocation4], 0
    %s12 = scalar_lea.sflag [#allocation4], 1
    %13 = vsyncpa %s12, 0
    loop: start=0, step=1, limit=4
    $region2: #{_mm_plain.1} parent=1 // loop_pre_header
      _
    $region3: #{_mm_plain.1} parent=1 // loop_header
      %s15 = sphi 0, %s19
      %p16 = scmp.ge.s32.totalorder %s15, 4
      %s25 = sphi 0, %s27
      %s28 = sphi 0, %s25
      %s29 = sphi 0, %s28
      %s45 = sphi 0, %s29
      %s49 = sphi 0, %s49
      %s51 = sphi 0, %s49
      %s52 = sphi 0, %s51
      %s66 = sphi 0, %s52
      %s72 = sphi 0, %s74
      %s75 = sphi 0, %s72
      %s76 = sphi 0, %s75
      %s92 = sphi 0, %s76
    $region4: #{_mm_plain.1} parent=1 // loop_header_branch
      %18 = sbr.rel (%p16) target = $region8
    $region5: #{_mm_plain.1} parent=1 // loop_body
      %s20 = ssub.s32 %s15, 1
      %s21 = ssub.s32 %s15, 2
      %s22 = sadd.s32 %s15, 1
      %s23 = ssub.s32 %s15, %s22
      %p24 = scmp.eq.s32.totalorder %s23, 0
      %s26 = sadd.s32 %s25, 1
      %s27 = scalar_select %p24, %s25, %s26
      %p30 = pneg %p24
      %p31 = scmp.eq.s32.totalorder %s15, 1
      %p32 = por %p30, %p31
      %p33 = scmp.ne.s32.totalorder %s25, %s28
      %p34 = scmp.eq.s32.totalorder %s15, 0
      %p35 = por %p33, %p34
      %p36 = scmp.ne.s32.totalorder %s25, %s28
      %p37 = scmp.eq.s32.totalorder %s20, 1
      %p38 = por %p36, %p37
      %p39 = scmp.ne.s32.totalorder %s28, %s29
      %p40 = scmp.eq.s32.totalorder %s20, 0
      %p41 = por %p39, %p40
      %p42 = scmp.ne.s32.totalorder %s28, %s29
      %p43 = scmp.eq.s32.totalorder %s21, 1
      %p44 = por %p42, %p43
      %p46 = scmp.ne.s32.totalorder %s29, %s45
      %p47 = scmp.eq.s32.totalorder %s21, 0
      %p48 = por %p46, %p47
      %s50 = sadd.s32 %s49, 1
      %p53 = scmp.eq.s32.totalorder %s15, 1
      %p54 = scmp.ne.s32.totalorder %s49, %s51
      %p55 = scmp.eq.s32.totalorder %s15, 0
      %p56 = por %p54, %p55
      %p57 = scmp.ne.s32.totalorder %s49, %s51
      %p58 = scmp.eq.s32.totalorder %s20, 1
      %p59 = por %p57, %p58
      %p60 = scmp.ne.s32.totalorder %s51, %s52
      %p61 = scmp.eq.s32.totalorder %s20, 0
      %p62 = por %p60, %p61
      %p63 = scmp.ne.s32.totalorder %s51, %s52
      %p64 = scmp.eq.s32.totalorder %s21, 1
      %p65 = por %p63, %p64
      %p67 = scmp.ne.s32.totalorder %s52, %s66
      %p68 = scmp.eq.s32.totalorder %s21, 0
      %p69 = por %p67, %p68
      %s70 = ssub.s32 %s15, %s22
      %p71 = scmp.eq.s32.totalorder %s70, 0
      %s73 = sadd.s32 %s72, 1
      %s74 = scalar_select %p71, %s72, %s73
      %p77 = pneg %p71
      %p78 = scmp.eq.s32.totalorder %s15, 1
      %p79 = por %p77, %p78
      %p80 = scmp.ne.s32.totalorder %s72, %s75
      %p81 = scmp.eq.s32.totalorder %s15, 0
      %p82 = por %p80, %p81
      %p83 = scmp.ne.s32.totalorder %s72, %s75
      %p84 = scmp.eq.s32.totalorder %s20, 1
      %p85 = por %p83, %p84
      %p86 = scmp.ne.s32.totalorder %s75, %s76
      %p87 = scmp.eq.s32.totalorder %s20, 0
      %p88 = por %p86, %p87
      %p89 = scmp.ne.s32.totalorder %s75, %s76
      %p90 = scmp.eq.s32.totalorder %s21, 1
      %p91 = por %p89, %p90
      %p93 = scmp.ne.s32.totalorder %s76, %s92
      %p94 = scmp.eq.s32.totalorder %s21, 0
      %p95 = por %p93, %p94
      %p96 = scmp.le.s32.totalorder 1, %s15
      %p97 = scmp.lt.s32.totalorder %s15, 3
      %p98 = pnand %p96, %p97
      %p99 = pneg %p98
      // Predicated region
      $region9: #{_mm_plain.1} parent=5 // pred_check
        _
      $region10: #{_mm_plain.1} parent=5 // pred_check_branch
        %101 = sbr.rel (%p98) target = $region12
      $region11: #{_mm_plain.1} parent=5 // pred_region
        %s102 = ssub.s32 %s15, 1
        // Predicated region
        $region13: #{_mm_plain.1} parent=11 // pred_check
          %p103 = pneg %p62
        $region14: #{_mm_plain.1} parent=11 // pred_check_branch
          %105 = sbr.rel (%p103) target = $region16
        $region15: #{_mm_plain.1} parent=11 // pred_region
          %107 = vsyncadd [#allocation6], 0
          %s108 = sshll.u32 %s1, 4
          %s109 = int_to_ptr.hbm [resolvable:$true] %s108
          %s110 = sshll.u32 [#allocation5], 4
          %s111 = int_to_ptr.vmem [resolvable:$true] %s110
          %116 = dma.hbm_to_vmem [thread:$0]  %s109, 2048, %s111, [#allocation6], 64, 64, 4
        $region16: #{_mm_plain.1} parent=11 // pred_fallthru
          _
      $region12: #{_mm_plain.1} parent=5 // pred_fallthru
        _
      %p117 = scmp.lt.s32.totalorder %s15, 2
      // Predicated region
      $region17: #{_mm_plain.1} parent=5 // pred_check
        %p118 = pneg %p117
      $region18: #{_mm_plain.1} parent=5 // pred_check_branch
        %120 = sbr.rel (%p118) target = $region20
      $region19: #{_mm_plain.1} parent=5 // pred_region
        // Predicated region
        $region21: #{_mm_plain.1} parent=19 // pred_check
          %p121 = pneg %p35
        $region22: #{_mm_plain.1} parent=19 // pred_check_branch
          %123 = sbr.rel (%p121) target = $region24
        $region23: #{_mm_plain.1} parent=19 // pred_region
          %s124 = sand.u32 %s25, 1
          %s125 = scalar_lea.sflag [#allocation3], %s124
          %s126 = sand.u32 %s25, 1
          %s127 = smul.addr %s126, 256
          %s128 = scalar_lea.vmem [#allocation2], %s127
          %s129 = smul.u32 32, %s15
          %131 = vsyncadd %s125, 0
          %s132 = smul.addr %s129, 2
          %s133 = smul.addr %s132, 4
          %s134 = scalar_lea.hbm %s0, %s133
          %s135 = sshll.u32 %s134, 4
          %s136 = int_to_ptr.hbm [resolvable:$true] %s135
          %s137 = sshll.u32 %s128, 4
          %s138 = int_to_ptr.vmem [resolvable:$true] %s137
          %143 = dma.hbm_to_vmem [thread:$0]  %s136, 4096, %s138, %s125, 128, 128, 8
        $region24: #{_mm_plain.1} parent=19 // pred_fallthru
          _
      $region20: #{_mm_plain.1} parent=5 // pred_fallthru
        _
      %p144 = scmp.le.s32.totalorder 1, %s15
      %p145 = scmp.lt.s32.totalorder %s15, 3
      %p146 = pnand %p144, %p145
      %p147 = pneg %p146
      // Predicated region
      $region25: #{_mm_plain.1} parent=5 // pred_check
        _
      $region26: #{_mm_plain.1} parent=5 // pred_check_branch
        %149 = sbr.rel (%p146) target = $region28
      $region27: #{_mm_plain.1} parent=5 // pred_region
        %s150 = ssub.s32 %s15, 1
        %s151 = sand.u32 %s28, 1
        %s152 = scalar_lea.sflag [#allocation3], %s151
        %s153 = sand.u32 %s28, 1
        %s154 = smul.addr %s153, 256
        %s155 = scalar_lea.vmem [#allocation2], %s154
        // Predicated region
        $region29: #{_mm_plain.1} parent=27 // pred_check
          %p156 = pneg %p41
        $region30: #{_mm_plain.1} parent=27 // pred_check_branch
          %158 = sbr.rel (%p156) target = $region32
        $region31: #{_mm_plain.1} parent=27 // pred_region
          %160 = dma.done %s152, 4096
        $region32: #{_mm_plain.1} parent=27 // pred_fallthru
          _
        // Predicated region
        $region33: #{_mm_plain.1} parent=27 // pred_check
          %p161 = pneg %p62
        $region34: #{_mm_plain.1} parent=27 // pred_check_branch
          %163 = sbr.rel (%p161) target = $region36
        $region35: #{_mm_plain.1} parent=27 // pred_region
          %165 = dma.done [#allocation6], 2048
        $region36: #{_mm_plain.1} parent=27 // pred_fallthru
          _
        %s166 = sand.u32 %s28, 1
        %s167 = scalar_lea.sflag [#allocation3], %s166
        %s168 = sand.u32 %s28, 1
        %s169 = smul.addr %s168, 256
        %s170 = scalar_lea.vmem [#allocation2], %s169
        %p171 = pneg %p41
        %p172 = pneg %p38
        %p173 = pneg %p62
        %p174 = pneg %p59
        %p175 = pneg %p88
        %p176 = pneg %p85
        %s177 = sand.u32 %s75, 1
        %s178 = scalar_lea.sflag [#allocation4], %s177
        %s179 = sand.u32 %s75, 1
        %s180 = smul.addr %s179, 128
        %s181 = scalar_lea.vmem [#allocation7], %s180
        %s182 = smul.u32 32, %s20
        %s183 = smul.u32 32, %s20
        %v184 = vld [vmem:[%s155] sm:$0xff]
        %v185 = vld [vmem:[%s155 + $0x8] sm:$0xff]
        %v186 = vld [vmem:[%s155 + $0x10] sm:$0xff]
        %v187 = vld [vmem:[%s155 + $0x18] sm:$0xff]
        %v188 = vld [vmem:[%s155 + $0x20] sm:$0xff]
        %v189 = vld [vmem:[%s155 + $0x28] sm:$0xff]
        %v190 = vld [vmem:[%s155 + $0x30] sm:$0xff]
        %v191 = vld [vmem:[%s155 + $0x38] sm:$0xff]
        %v192 = vld [vmem:[%s155 + $0x40] sm:$0xff]
        %v193 = vld [vmem:[%s155 + $0x48] sm:$0xff]
        %v194 = vld [vmem:[%s155 + $0x50] sm:$0xff]
        %v195 = vld [vmem:[%s155 + $0x58] sm:$0xff]
        %v196 = vld [vmem:[%s155 + $0x60] sm:$0xff]
        %v197 = vld [vmem:[%s155 + $0x68] sm:$0xff]
        %v198 = vld [vmem:[%s155 + $0x70] sm:$0xff]
        %v199 = vld [vmem:[%s155 + $0x78] sm:$0xff]
        %v200 = vld [vmem:[%s155 + $0x80] sm:$0xff]
        %v201 = vld [vmem:[%s155 + $0x88] sm:$0xff]
        %v202 = vld [vmem:[%s155 + $0x90] sm:$0xff]
        %v203 = vld [vmem:[%s155 + $0x98] sm:$0xff]
        %v204 = vld [vmem:[%s155 + $0xa0] sm:$0xff]
        %v205 = vld [vmem:[%s155 + $0xa8] sm:$0xff]
        %v206 = vld [vmem:[%s155 + $0xb0] sm:$0xff]
        %v207 = vld [vmem:[%s155 + $0xb8] sm:$0xff]
        %v208 = vld [vmem:[%s155 + $0xc0] sm:$0xff]
        %v209 = vld [vmem:[%s155 + $0xc8] sm:$0xff]
        %v210 = vld [vmem:[%s155 + $0xd0] sm:$0xff]
        %v211 = vld [vmem:[%s155 + $0xd8] sm:$0xff]
        %v212 = vld [vmem:[%s155 + $0xe0] sm:$0xff]
        %v213 = vld [vmem:[%s155 + $0xe8] sm:$0xff]
        %v214 = vld [vmem:[%s155 + $0xf0] sm:$0xff]
        %v215 = vld [vmem:[%s155 + $0xf8] sm:$0xff]
        %v216 = vld [vmem:[#allocation5] sm:$0xf]
        %v217 = vld [vmem:[#allocation5 + $0x4] sm:$0xf]
        %v218 = vld [vmem:[#allocation5 + $0x8] sm:$0xf]
        %v219 = vld [vmem:[#allocation5 + $0xc] sm:$0xf]
        %v220 = vld [vmem:[#allocation5 + $0x10] sm:$0xf]
        %v221 = vld [vmem:[#allocation5 + $0x14] sm:$0xf]
        %v222 = vld [vmem:[#allocation5 + $0x18] sm:$0xf]
        %v223 = vld [vmem:[#allocation5 + $0x1c] sm:$0xf]
        %v224 = vld [vmem:[#allocation5 + $0x20] sm:$0xf]
        %v225 = vld [vmem:[#allocation5 + $0x24] sm:$0xf]
        %v226 = vld [vmem:[#allocation5 + $0x28] sm:$0xf]
        %v227 = vld [vmem:[#allocation5 + $0x2c] sm:$0xf]
        %v228 = vld [vmem:[#allocation5 + $0x30] sm:$0xf]
        %v229 = vld [vmem:[#allocation5 + $0x34] sm:$0xf]
        %v230 = vld [vmem:[#allocation5 + $0x38] sm:$0xf]
        %v231 = vld [vmem:[#allocation5 + $0x3c] sm:$0xf]
        %v232 = vld [vmem:[#allocation5 + $0x40] sm:$0xf]
        %v233 = vld [vmem:[#allocation5 + $0x44] sm:$0xf]
        %v234 = vld [vmem:[#allocation5 + $0x48] sm:$0xf]
        %v235 = vld [vmem:[#allocation5 + $0x4c] sm:$0xf]
        %v236 = vld [vmem:[#allocation5 + $0x50] sm:$0xf]
        %v237 = vld [vmem:[#allocation5 + $0x54] sm:$0xf]
        %v238 = vld [vmem:[#allocation5 + $0x58] sm:$0xf]
        %v239 = vld [vmem:[#allocation5 + $0x5c] sm:$0xf]
        %v240 = vld [vmem:[#allocation5 + $0x60] sm:$0xf]
        %v241 = vld [vmem:[#allocation5 + $0x64] sm:$0xf]
        %v242 = vld [vmem:[#allocation5 + $0x68] sm:$0xf]
        %v243 = vld [vmem:[#allocation5 + $0x6c] sm:$0xf]
        %v244 = vld [vmem:[#allocation5 + $0x70] sm:$0xf]
        %v245 = vld [vmem:[#allocation5 + $0x74] sm:$0xf]
        %v246 = vld [vmem:[#allocation5 + $0x78] sm:$0xf]
        %v247 = vld [vmem:[#allocation5 + $0x7c] sm:$0xf]
        %v280 = vunpack.c.l.b16 %v184
        %v281 = vunpack.c.h.b16 %v184
        %v282 = vunpack.c.l.b16 %v185
        %v283 = vunpack.c.h.b16 %v185
        %v284 = vunpack.c.l.b16 %v186
        %v285 = vunpack.c.h.b16 %v186
        %v286 = vunpack.c.l.b16 %v187
        %v287 = vunpack.c.h.b16 %v187
        %v288 = vunpack.c.l.b16 %v188
        %v289 = vunpack.c.h.b16 %v188
        %v290 = vunpack.c.l.b16 %v189
        %v291 = vunpack.c.h.b16 %v189
        %v292 = vunpack.c.l.b16 %v190
        %v293 = vunpack.c.h.b16 %v190
        %v294 = vunpack.c.l.b16 %v191
        %v295 = vunpack.c.h.b16 %v191
        %v296 = vunpack.c.l.b16 %v192
        %v297 = vunpack.c.h.b16 %v192
        %v298 = vunpack.c.l.b16 %v193
        %v299 = vunpack.c.h.b16 %v193
        %v300 = vunpack.c.l.b16 %v194
        %v301 = vunpack.c.h.b16 %v194
        %v302 = vunpack.c.l.b16 %v195
        %v303 = vunpack.c.h.b16 %v195
        %v304 = vunpack.c.l.b16 %v196
        %v305 = vunpack.c.h.b16 %v196
        %v306 = vunpack.c.l.b16 %v197
        %v307 = vunpack.c.h.b16 %v197
        %v308 = vunpack.c.l.b16 %v198
        %v309 = vunpack.c.h.b16 %v198
        %v310 = vunpack.c.l.b16 %v199
        %v311 = vunpack.c.h.b16 %v199
        %v312 = vunpack.c.l.b16 %v200
        %v313 = vunpack.c.h.b16 %v200
        %v314 = vunpack.c.l.b16 %v201
        %v315 = vunpack.c.h.b16 %v201
        %v316 = vunpack.c.l.b16 %v202
        %v317 = vunpack.c.h.b16 %v202
        %v318 = vunpack.c.l.b16 %v203
        %v319 = vunpack.c.h.b16 %v203
        %v320 = vunpack.c.l.b16 %v204
        %v321 = vunpack.c.h.b16 %v204
        %v322 = vunpack.c.l.b16 %v205
        %v323 = vunpack.c.h.b16 %v205
        %v324 = vunpack.c.l.b16 %v206
        %v325 = vunpack.c.h.b16 %v206
        %v326 = vunpack.c.l.b16 %v207
        %v327 = vunpack.c.h.b16 %v207
        %v328 = vunpack.c.l.b16 %v208
        %v329 = vunpack.c.h.b16 %v208
        %v330 = vunpack.c.l.b16 %v209
        %v331 = vunpack.c.h.b16 %v209
        %v332 = vunpack.c.l.b16 %v210
        %v333 = vunpack.c.h.b16 %v210
        %v334 = vunpack.c.l.b16 %v211
        %v335 = vunpack.c.h.b16 %v211
        %v336 = vunpack.c.l.b16 %v212
        %v337 = vunpack.c.h.b16 %v212
        %v338 = vunpack.c.l.b16 %v213
        %v339 = vunpack.c.h.b16 %v213
        %v340 = vunpack.c.l.b16 %v214
        %v341 = vunpack.c.h.b16 %v214
        %v342 = vunpack.c.l.b16 %v215
        %v343 = vunpack.c.h.b16 %v215
        %v344 = vpack.c.b16 %v282, %v280
        %v345 = vpack.c.b16 %v283, %v281
        %v346 = vpack.c.b16 %v286, %v284
        %v347 = vpack.c.b16 %v287, %v285
        %v348 = vpack.c.b16 %v290, %v288
        %v349 = vpack.c.b16 %v291, %v289
        %v350 = vpack.c.b16 %v294, %v292
        %v351 = vpack.c.b16 %v295, %v293
        %v352 = vpack.c.b16 %v298, %v296
        %v353 = vpack.c.b16 %v299, %v297
        %v354 = vpack.c.b16 %v302, %v300
        %v355 = vpack.c.b16 %v303, %v301
        %v356 = vpack.c.b16 %v306, %v304
        %v357 = vpack.c.b16 %v307, %v305
        %v358 = vpack.c.b16 %v310, %v308
        %v359 = vpack.c.b16 %v311, %v309
        %v360 = vpack.c.b16 %v314, %v312
        %v361 = vpack.c.b16 %v315, %v313
        %v362 = vpack.c.b16 %v318, %v316
        %v363 = vpack.c.b16 %v319, %v317
        %v364 = vpack.c.b16 %v322, %v320
        %v365 = vpack.c.b16 %v323, %v321
        %v366 = vpack.c.b16 %v326, %v324
        %v367 = vpack.c.b16 %v327, %v325
        %v368 = vpack.c.b16 %v330, %v328
        %v369 = vpack.c.b16 %v331, %v329
        %v370 = vpack.c.b16 %v334, %v332
        %v371 = vpack.c.b16 %v335, %v333
        %v372 = vpack.c.b16 %v338, %v336
        %v373 = vpack.c.b16 %v339, %v337
        %v374 = vpack.c.b16 %v342, %v340
        %v375 = vpack.c.b16 %v343, %v341
        %v440 = vunpack.c.l.b16 %v216
        %v441 = vunpack.c.l.b16 %v217
        %v442 = vunpack.c.l.b16 %v218
        %v443 = vunpack.c.l.b16 %v219
        %v444 = vunpack.c.l.b16 %v220
        %v445 = vunpack.c.l.b16 %v221
        %v446 = vunpack.c.l.b16 %v222
        %v447 = vunpack.c.l.b16 %v223
        %v448 = vunpack.c.l.b16 %v224
        %v449 = vunpack.c.l.b16 %v225
        %v450 = vunpack.c.l.b16 %v226
        %v451 = vunpack.c.l.b16 %v227
        %v452 = vunpack.c.l.b16 %v228
        %v453 = vunpack.c.l.b16 %v229
        %v454 = vunpack.c.l.b16 %v230
        %v455 = vunpack.c.l.b16 %v231
        %v456 = vunpack.c.l.b16 %v232
        %v457 = vunpack.c.l.b16 %v233
        %v458 = vunpack.c.l.b16 %v234
        %v459 = vunpack.c.l.b16 %v235
        %v460 = vunpack.c.l.b16 %v236
        %v461 = vunpack.c.l.b16 %v237
        %v462 = vunpack.c.l.b16 %v238
        %v463 = vunpack.c.l.b16 %v239
        %v464 = vunpack.c.l.b16 %v240
        %v465 = vunpack.c.l.b16 %v241
        %v466 = vunpack.c.l.b16 %v242
        %v467 = vunpack.c.l.b16 %v243
        %v468 = vunpack.c.l.b16 %v244
        %v469 = vunpack.c.l.b16 %v245
        %v470 = vunpack.c.l.b16 %v246
        %v471 = vunpack.c.l.b16 %v247
        %v472 = vpack.c.b16 %v441, %v440
        %v473 = vpack.c.b16 %v443, %v442
        %v474 = vpack.c.b16 %v445, %v444
        %v475 = vpack.c.b16 %v447, %v446
        %v476 = vpack.c.b16 %v449, %v448
        %v477 = vpack.c.b16 %v451, %v450
        %v478 = vpack.c.b16 %v453, %v452
        %v479 = vpack.c.b16 %v455, %v454
        %v480 = vpack.c.b16 %v457, %v456
        %v481 = vpack.c.b16 %v459, %v458
        %v482 = vpack.c.b16 %v461, %v460
        %v483 = vpack.c.b16 %v463, %v462
        %v484 = vpack.c.b16 %v465, %v464
        %v485 = vpack.c.b16 %v467, %v466
        %v486 = vpack.c.b16 %v469, %v468
        %v487 = vpack.c.b16 %v471, %v470
        %504 = vmatpush.bf16.msra.mxu0 %v479
        %505 = vmatpush.bf16.msra.mxu0 %v478
        %506 = vmatpush.bf16.msra.mxu0 %v477
        %507 = vmatpush.bf16.msra.mxu0 %v476
        %508 = vmatpush.bf16.msra.mxu0 %v475
        %509 = vmatpush.bf16.msra.mxu0 %v474
        %510 = vmatpush.bf16.msra.mxu0 %v473
        %511 = vmatpush.bf16.msra.mxu0 %v472
        %512 = vmatmul.bf16.gmra.mxu0 %v344
        %v513 = vpop.f32.mrf.mxu0
        %v514 = vadd.f32 0.0, %v513
        %v515 = vpop.f32.mrf.mxu0
        %v516 = vadd.f32 0.0, %v515
        %517 = vmatmul.bf16.gmra.mxu0 %v346
        %v518 = vpop.f32.mrf.mxu0
        %v519 = vadd.f32 0.0, %v518
        %v520 = vpop.f32.mrf.mxu0
        %v521 = vadd.f32 0.0, %v520
        %522 = vmatmul.bf16.gmra.mxu0 %v348
        %v523 = vpop.f32.mrf.mxu0
        %v524 = vadd.f32 0.0, %v523
        %v525 = vpop.f32.mrf.mxu0
        %v526 = vadd.f32 0.0, %v525
        %527 = vmatmul.bf16.gmra.mxu0 %v350
        %v528 = vpop.f32.mrf.mxu0
        %v529 = vadd.f32 0.0, %v528
        %v530 = vpop.f32.mrf.mxu0
        %v531 = vadd.f32 0.0, %v530
        %532 = vmatmul.bf16.gmra.mxu0 %v352
        %v533 = vpop.f32.mrf.mxu0
        %v534 = vadd.f32 0.0, %v533
        %v535 = vpop.f32.mrf.mxu0
        %v536 = vadd.f32 0.0, %v535
        %537 = vmatmul.bf16.gmra.mxu0 %v354
        %v538 = vpop.f32.mrf.mxu0
        %v539 = vadd.f32 0.0, %v538
        %v540 = vpop.f32.mrf.mxu0
        %v541 = vadd.f32 0.0, %v540
        %542 = vmatmul.bf16.gmra.mxu0 %v356
        %v543 = vpop.f32.mrf.mxu0
        %v544 = vadd.f32 0.0, %v543
        %v545 = vpop.f32.mrf.mxu0
        %v546 = vadd.f32 0.0, %v545
        %547 = vmatmul.bf16.gmra.mxu0 %v358
        %v548 = vpop.f32.mrf.mxu0
        %v549 = vadd.f32 0.0, %v548
        %v550 = vpop.f32.mrf.mxu0
        %v551 = vadd.f32 0.0, %v550
        %552 = vmatmul.bf16.gmra.mxu0 %v360
        %v553 = vpop.f32.mrf.mxu0
        %v554 = vadd.f32 0.0, %v553
        %v555 = vpop.f32.mrf.mxu0
        %v556 = vadd.f32 0.0, %v555
        %557 = vmatmul.bf16.gmra.mxu0 %v362
        %v558 = vpop.f32.mrf.mxu0
        %v559 = vadd.f32 0.0, %v558
        %v560 = vpop.f32.mrf.mxu0
        %v561 = vadd.f32 0.0, %v560
        %562 = vmatmul.bf16.gmra.mxu0 %v364
        %v563 = vpop.f32.mrf.mxu0
        %v564 = vadd.f32 0.0, %v563
        %v565 = vpop.f32.mrf.mxu0
        %v566 = vadd.f32 0.0, %v565
        %567 = vmatmul.bf16.gmra.mxu0 %v366
        %v568 = vpop.f32.mrf.mxu0
        %v569 = vadd.f32 0.0, %v568
        %v570 = vpop.f32.mrf.mxu0
        %v571 = vadd.f32 0.0, %v570
        %572 = vmatmul.bf16.gmra.mxu0 %v368
        %v573 = vpop.f32.mrf.mxu0
        %v574 = vadd.f32 0.0, %v573
        %v575 = vpop.f32.mrf.mxu0
        %v576 = vadd.f32 0.0, %v575
        %577 = vmatmul.bf16.gmra.mxu0 %v370
        %v578 = vpop.f32.mrf.mxu0
        %v579 = vadd.f32 0.0, %v578
        %v580 = vpop.f32.mrf.mxu0
        %v581 = vadd.f32 0.0, %v580
        %582 = vmatmul.bf16.gmra.mxu0 %v372
        %v583 = vpop.f32.mrf.mxu0
        %v584 = vadd.f32 0.0, %v583
        %v585 = vpop.f32.mrf.mxu0
        %v586 = vadd.f32 0.0, %v585
        %587 = vmatmul.bf16.gmra.mxu0 %v374
        %v588 = vpop.f32.mrf.mxu0
        %v589 = vadd.f32 0.0, %v588
        %v590 = vpop.f32.mrf.mxu0
        %v591 = vadd.f32 0.0, %v590
        %592 = vdwg.mxu0
        %593 = vmatpush.bf16.msra.mxu0 %v487
        %594 = vmatpush.bf16.msra.mxu0 %v486
        %595 = vmatpush.bf16.msra.mxu0 %v485
        %596 = vmatpush.bf16.msra.mxu0 %v484
        %597 = vmatpush.bf16.msra.mxu0 %v483
        %598 = vmatpush.bf16.msra.mxu0 %v482
        %599 = vmatpush.bf16.msra.mxu0 %v481
        %600 = vmatpush.bf16.msra.mxu0 %v480
        %601 = vmatmul.bf16.gmra.mxu0 %v345
        %v602 = vpop.f32.mrf.mxu0
        %v603 = vadd.f32 %v514, %v602
        %v604 = vpop.f32.mrf.mxu0
        %v605 = vadd.f32 %v516, %v604
        %606 = vmatmul.bf16.gmra.mxu0 %v347
        %v607 = vpop.f32.mrf.mxu0
        %v608 = vadd.f32 %v519, %v607
        %v609 = vpop.f32.mrf.mxu0
        %v610 = vadd.f32 %v521, %v609
        %611 = vmatmul.bf16.gmra.mxu0 %v349
        %v612 = vpop.f32.mrf.mxu0
        %v613 = vadd.f32 %v524, %v612
        %v614 = vpop.f32.mrf.mxu0
        %v615 = vadd.f32 %v526, %v614
        %616 = vmatmul.bf16.gmra.mxu0 %v351
        %v617 = vpop.f32.mrf.mxu0
        %v618 = vadd.f32 %v529, %v617
        %v619 = vpop.f32.mrf.mxu0
        %v620 = vadd.f32 %v531, %v619
        %621 = vmatmul.bf16.gmra.mxu0 %v353
        %v622 = vpop.f32.mrf.mxu0
        %v623 = vadd.f32 %v534, %v622
        %v624 = vpop.f32.mrf.mxu0
        %v625 = vadd.f32 %v536, %v624
        %626 = vmatmul.bf16.gmra.mxu0 %v355
        %v627 = vpop.f32.mrf.mxu0
        %v628 = vadd.f32 %v539, %v627
        %v629 = vpop.f32.mrf.mxu0
        %v630 = vadd.f32 %v541, %v629
        %631 = vmatmul.bf16.gmra.mxu0 %v357
        %v632 = vpop.f32.mrf.mxu0
        %v633 = vadd.f32 %v544, %v632
        %v634 = vpop.f32.mrf.mxu0
        %v635 = vadd.f32 %v546, %v634
        %636 = vmatmul.bf16.gmra.mxu0 %v359
        %v637 = vpop.f32.mrf.mxu0
        %v638 = vadd.f32 %v549, %v637
        %v639 = vpop.f32.mrf.mxu0
        %v640 = vadd.f32 %v551, %v639
        %641 = vmatmul.bf16.gmra.mxu0 %v361
        %v642 = vpop.f32.mrf.mxu0
        %v643 = vadd.f32 %v554, %v642
        %v644 = vpop.f32.mrf.mxu0
        %v645 = vadd.f32 %v556, %v644
        %646 = vmatmul.bf16.gmra.mxu0 %v363
        %v647 = vpop.f32.mrf.mxu0
        %v648 = vadd.f32 %v559, %v647
        %v649 = vpop.f32.mrf.mxu0
        %v650 = vadd.f32 %v561, %v649
        %651 = vmatmul.bf16.gmra.mxu0 %v365
        %v652 = vpop.f32.mrf.mxu0
        %v653 = vadd.f32 %v564, %v652
        %v654 = vpop.f32.mrf.mxu0
        %v655 = vadd.f32 %v566, %v654
        %656 = vmatmul.bf16.gmra.mxu0 %v367
        %v657 = vpop.f32.mrf.mxu0
        %v658 = vadd.f32 %v569, %v657
        %v659 = vpop.f32.mrf.mxu0
        %v660 = vadd.f32 %v571, %v659
        %661 = vmatmul.bf16.gmra.mxu0 %v369
        %v662 = vpop.f32.mrf.mxu0
        %v663 = vadd.f32 %v574, %v662
        %v664 = vpop.f32.mrf.mxu0
        %v665 = vadd.f32 %v576, %v664
        %666 = vmatmul.bf16.gmra.mxu0 %v371
        %v667 = vpop.f32.mrf.mxu0
        %v668 = vadd.f32 %v579, %v667
        %v669 = vpop.f32.mrf.mxu0
        %v670 = vadd.f32 %v581, %v669
        %671 = vmatmul.bf16.gmra.mxu0 %v373
        %v672 = vpop.f32.mrf.mxu0
        %v673 = vadd.f32 %v584, %v672
        %v674 = vpop.f32.mrf.mxu0
        %v675 = vadd.f32 %v586, %v674
        %676 = vmatmul.bf16.gmra.mxu0 %v375
        %v677 = vpop.f32.mrf.mxu0
        %v678 = vadd.f32 %v589, %v677
        %v679 = vpop.f32.mrf.mxu0
        %v680 = vadd.f32 %v591, %v679
        %681 = vdwg.mxu0
        %v682 = vpack.c.bf16 %v603, %v603
        %v683 = vpack.c.bf16 %v605, %v605
        %v684 = vpack.c.bf16 %v608, %v608
        %v685 = vpack.c.bf16 %v610, %v610
        %v686 = vpack.c.bf16 %v613, %v613
        %v687 = vpack.c.bf16 %v615, %v615
        %v688 = vpack.c.bf16 %v618, %v618
        %v689 = vpack.c.bf16 %v620, %v620
        %v690 = vpack.c.bf16 %v623, %v623
        %v691 = vpack.c.bf16 %v625, %v625
        %v692 = vpack.c.bf16 %v628, %v628
        %v693 = vpack.c.bf16 %v630, %v630
        %v694 = vpack.c.bf16 %v633, %v633
        %v695 = vpack.c.bf16 %v635, %v635
        %v696 = vpack.c.bf16 %v638, %v638
        %v697 = vpack.c.bf16 %v640, %v640
        %v698 = vpack.c.bf16 %v643, %v643
        %v699 = vpack.c.bf16 %v645, %v645
        %v700 = vpack.c.bf16 %v648, %v648
        %v701 = vpack.c.bf16 %v650, %v650
        %v702 = vpack.c.bf16 %v653, %v653
        %v703 = vpack.c.bf16 %v655, %v655
        %v704 = vpack.c.bf16 %v658, %v658
        %v705 = vpack.c.bf16 %v660, %v660
        %v706 = vpack.c.bf16 %v663, %v663
        %v707 = vpack.c.bf16 %v665, %v665
        %v708 = vpack.c.bf16 %v668, %v668
        %v709 = vpack.c.bf16 %v670, %v670
        %v710 = vpack.c.bf16 %v673, %v673
        %v711 = vpack.c.bf16 %v675, %v675
        %v712 = vpack.c.bf16 %v678, %v678
        %v713 = vpack.c.bf16 %v680, %v680
        %714 = vst [vmem:[%s181] sm:$0xf] %v682
        %715 = vst [vmem:[%s181 + $0x4] sm:$0xf] %v683
        %716 = vst [vmem:[%s181 + $0x8] sm:$0xf] %v684
        %717 = vst [vmem:[%s181 + $0xc] sm:$0xf] %v685
        %718 = vst [vmem:[%s181 + $0x10] sm:$0xf] %v686
        %719 = vst [vmem:[%s181 + $0x14] sm:$0xf] %v687
        %720 = vst [vmem:[%s181 + $0x18] sm:$0xf] %v688
        %721 = vst [vmem:[%s181 + $0x1c] sm:$0xf] %v689
        %722 = vst [vmem:[%s181 + $0x20] sm:$0xf] %v690
        %723 = vst [vmem:[%s181 + $0x24] sm:$0xf] %v691
        %724 = vst [vmem:[%s181 + $0x28] sm:$0xf] %v692
        %725 = vst [vmem:[%s181 + $0x2c] sm:$0xf] %v693
        %726 = vst [vmem:[%s181 + $0x30] sm:$0xf] %v694
        %727 = vst [vmem:[%s181 + $0x34] sm:$0xf] %v695
        %728 = vst [vmem:[%s181 + $0x38] sm:$0xf] %v696
        %729 = vst [vmem:[%s181 + $0x3c] sm:$0xf] %v697
        %730 = vst [vmem:[%s181 + $0x40] sm:$0xf] %v698
        %731 = vst [vmem:[%s181 + $0x44] sm:$0xf] %v699
        %732 = vst [vmem:[%s181 + $0x48] sm:$0xf] %v700
        %733 = vst [vmem:[%s181 + $0x4c] sm:$0xf] %v701
        %734 = vst [vmem:[%s181 + $0x50] sm:$0xf] %v702
        %735 = vst [vmem:[%s181 + $0x54] sm:$0xf] %v703
        %736 = vst [vmem:[%s181 + $0x58] sm:$0xf] %v704
        %737 = vst [vmem:[%s181 + $0x5c] sm:$0xf] %v705
        %738 = vst [vmem:[%s181 + $0x60] sm:$0xf] %v706
        %739 = vst [vmem:[%s181 + $0x64] sm:$0xf] %v707
        %740 = vst [vmem:[%s181 + $0x68] sm:$0xf] %v708
        %741 = vst [vmem:[%s181 + $0x6c] sm:$0xf] %v709
        %742 = vst [vmem:[%s181 + $0x70] sm:$0xf] %v710
        %743 = vst [vmem:[%s181 + $0x74] sm:$0xf] %v711
        %744 = vst [vmem:[%s181 + $0x78] sm:$0xf] %v712
        %745 = vst [vmem:[%s181 + $0x7c] sm:$0xf] %v713
        %s746 = sand.u32 %s75, 1
        %s747 = scalar_lea.sflag [#allocation4], %s746
        %s748 = sand.u32 %s75, 1
        %s749 = smul.addr %s748, 128
        %s750 = scalar_lea.vmem [#allocation7], %s749
        // Predicated region
        $region37: #{_mm_plain.1} parent=27 // pred_check
          %p751 = pneg %p85
        $region38: #{_mm_plain.1} parent=27 // pred_check_branch
          %753 = sbr.rel (%p751) target = $region40
        $region39: #{_mm_plain.1} parent=27 // pred_region
          %s754 = smul.u32 32, %s20
          %756 = vsyncadd %s747, 0
          %s757 = smul.addr %s754, 4
          %s758 = scalar_lea.hbm %s2, %s757
          %s759 = sshll.u32 %s750, 4
          %s760 = int_to_ptr.vmem [resolvable:$true] %s759
          %s761 = sshll.u32 %s758, 4
          %s762 = int_to_ptr.hbm [resolvable:$true] %s761
          %767 = dma.vmem_to_hbm [thread:$0]  %s760, 2048, %s762, %s747, 64, 64, 4
        $region40: #{_mm_plain.1} parent=27 // pred_fallthru
          _
      $region28: #{_mm_plain.1} parent=5 // pred_fallthru
        _
      %p768 = scmp.le.s32.totalorder 2, %s15
      // Predicated region
      $region41: #{_mm_plain.1} parent=5 // pred_check
        %p769 = pneg %p768
      $region42: #{_mm_plain.1} parent=5 // pred_check_branch
        %771 = sbr.rel (%p769) target = $region44
      $region43: #{_mm_plain.1} parent=5 // pred_region
        %s772 = ssub.s32 %s15, 2
        // Predicated region
        $region45: #{_mm_plain.1} parent=43 // pred_check
          %p773 = pneg %p91
        $region46: #{_mm_plain.1} parent=43 // pred_check_branch
          %775 = sbr.rel (%p773) target = $region48
        $region47: #{_mm_plain.1} parent=43 // pred_region
          %s776 = sand.u32 %s76, 1
          %s777 = scalar_lea.sflag [#allocation4], %s776
          %s778 = sand.u32 %s76, 1
          %s779 = smul.addr %s778, 128
          %s780 = scalar_lea.vmem [#allocation7], %s779
          %782 = dma.done %s777, 2048
        $region48: #{_mm_plain.1} parent=43 // pred_fallthru
          _
      $region44: #{_mm_plain.1} parent=5 // pred_fallthru
        _
    $region6: #{_mm_plain.1} parent=1 // loop_footer
      %s19 = sadd.s32 1, %s15
    $region7: #{_mm_plain.1} parent=1 // loop_footer_branch
      %14 = sbr.rel target = $region3
    $region8: #{_mm_plain.1} parent=1 // loop_exit
      _
    %783 = vsyncpa [#allocation3], 1
    %s784 = scalar_lea.sflag [#allocation3], 1
    %785 = vsyncpa %s784, 1
    %786 = vsyncpa [#allocation6], 1
    %787 = vsyncpa [#allocation4], 1
    %s788 = scalar_lea.sflag [#allocation4], 1
    %789 = vsyncpa %s788, 1

</llo_original>
